<compile_context>
chip_gen: v7x
topology: tpu7x:2x2x1
jax: 0.10.0
libtpu: 0.0.40
codegen_flags: <defaults>
</compile_context>

<pallas_src>
import functools

import jax
import jax.numpy as jnp
from jax.experimental import pallas as pl
from jax.experimental.pallas import tpu as pltpu

_NEG_SLOPE = 0.01  # F.leaky_relu default negative_slope
_MIB = 1024 * 1024


def _round_up(a, b):
    return (a + b - 1) // b * b


def _plan_km(in_dim, out_dim):
    """Deterministic (block_m, padded_m, block_k, padded_k) from the layer dims."""
    padded_m = _round_up(out_dim, 128)            # lane-dense output columns
    if padded_m >= 512 and padded_m % 512 == 0:
        block_m = 512
    elif padded_m % 256 == 0:
        block_m = 256
    else:
        block_m = 128
    padded_k = _round_up(in_dim, 128)             # K zero-padded -> tiles always exact
    block_k = 128
    for cand in (1024, 512, 256, 128):
        if padded_k % cand == 0:
            block_k = cand
            break
    return block_m, padded_m, block_k, padded_k


def _vmem_budget_bytes():
    """Max scoped-VMEM we are willing to request, derived from the chip."""
    cap = 64 * _MIB  # assume the smallest generation (v7x) when query unavailable
    try:
        info = pltpu.get_tpu_info()
        cap = int(getattr(info, "vmem_capacity_bytes", cap) or cap)
    except Exception:
        pass
    return max(16 * _MIB, min(int(cap * 0.6), cap - 24 * _MIB))


def prepare_fc_weight(weight):
    """One-time init-step preprocessing of the torch-layout weight [out_dim, in_dim].

    Returns a bf16 [padded_k, padded_m] array: transposed to the MXU-friendly
    (K, N) orientation and zero-padded, so padded K rows / padded output
    columns contribute exactly zero to the matmul.
    """
    out_dim, in_dim = weight.shape
    _, padded_m, _, padded_k = _plan_km(in_dim, out_dim)
    w = jnp.asarray(weight, dtype=jnp.bfloat16).T            # [in_dim, out_dim]
    return jnp.pad(w, ((0, padded_k - in_dim), (0, padded_m - out_dim)))


def _fc_kernel(x_ref, w_ref, o_ref, acc_ref):
    """One (block_n, block_m) output tile; K-reduction over grid axis 2."""
    k = pl.program_id(2)

    @pl.when(k == 0)
    def _():
        acc_ref[...] = jnp.zeros_like(acc_ref)

    a = x_ref[...].astype(jnp.bfloat16)  # no-op if x is already bf16
    acc_ref[...] += jnp.dot(a, w_ref[...], preferred_element_type=jnp.float32)

    @pl.when(k == pl.num_programs(2) - 1)
    def _():
        y = acc_ref[...]
        o_ref[...] = jnp.where(y >= 0, y, _NEG_SLOPE * y).astype(o_ref.dtype)


@functools.partial(jax.jit, static_argnames=("out_dim", "out_dtype", "block_n"))
def fc_forward(x, w_prepped, *, out_dim, out_dtype=None, block_n=None):
    """x: [N, in_dim]; w_prepped: output of prepare_fc_weight (bf16 [K_pad, M_pad])."""
    n, in_dim = x.shape
    block_m, padded_m, block_k, padded_k = _plan_km(in_dim, out_dim)
    assert w_prepped.shape == (padded_k, padded_m), (
        w_prepped.shape, (padded_k, padded_m))
    out_dtype = x.dtype if out_dtype is None else out_dtype

    m_tiles = padded_m // block_m
    k_tiles = padded_k // block_k

    # --- x operand: avoid standalone HBM cast passes when possible -----------
    if padded_k != in_dim:
        # K must be zero-padded so partial depth never contaminates the dot.
        # TODO(synk): have the producing layer emit K-padded bf16 activations
        # so this per-call pad pass disappears too.
        x_in = jnp.pad(x.astype(jnp.bfloat16), ((0, 0), (0, padded_k - in_dim)))
    elif x.dtype == jnp.bfloat16:
        x_in = x
    elif m_tiles <= 2:
        # Few out_dim tiles: feed f32 blocks and cast on the VPU inside the
        # kernel -- cheaper than a separate full read+write cast pass over x.
        x_in = x
    else:
        x_in = x.astype(jnp.bfloat16)
    x_bytes = jnp.dtype(x_in.dtype).itemsize
    out_bytes = jnp.dtype(out_dtype).itemsize

    # --- batch tiling: large tiles => weight streamed from HBM fewer times ---
    if block_n is None:
        block_n = 2048
    block_n = min(block_n, _round_up(n, 8))

    def _norm_n(bn):
        bn = max(8, bn)
        return n if bn >= n else _round_up(bn, 8)

    block_n = _norm_n(block_n)

    budget = _vmem_budget_bytes()

    def _vmem_bytes(bn):
        return (2 * bn * block_k * x_bytes        # x, double-buffered
                + 2 * block_k * block_m * 2       # w (bf16), double-buffered
                + 2 * bn * block_m * out_bytes    # out, double-buffered
                + bn * block_m * 4)               # f32 accumulator

    while _vmem_bytes(block_n) + 4 * _MIB > budget and block_n > 8:
        block_n = _norm_n(block_n // 2)

    # v7x megacore: make sure both TensorCores get at least one parallel block.
    if pl.cdiv(n, block_n) * m_tiles == 1:
        if n >= 16:
            block_n = _norm_n(-(-n // 2))
        elif block_m > 128:
            block_m = block_m // 2
            m_tiles = padded_m // block_m

    n_tiles = pl.cdiv(n, block_n)
    grid = (n_tiles, m_tiles, k_tiles)

    vmem_limit = int(max(16 * _MIB, min(_vmem_bytes(block_n) + 4 * _MIB, budget)))

    cost = pl.CostEstimate(
        flops=2 * n * in_dim * out_dim,
        transcendentals=0,
        bytes_accessed=(m_tiles * n * padded_k * x_bytes       # x re-read per M tile
                        + n_tiles * padded_k * padded_m * 2    # weight per batch tile
                        + n * padded_m * out_bytes),
    )

    out_padded = pl.pallas_call(
        _fc_kernel,
        out_shape=jax.ShapeDtypeStruct((n, padded_m), out_dtype),
        grid_spec=pltpu.PrefetchScalarGridSpec(
            num_scalar_prefetch=0,
            grid=grid,
            in_specs=[
                pl.BlockSpec((block_n, block_k), lambda i, j, k: (i, k)),
                pl.BlockSpec((block_k, block_m), lambda i, j, k: (k, j)),
            ],
            out_specs=pl.BlockSpec((block_n, block_m), lambda i, j, k: (i, j)),
            scratch_shapes=[pltpu.VMEM((block_n, block_m), jnp.float32)],
        ),
        compiler_params=pltpu.CompilerParams(
            dimension_semantics=("parallel", "parallel", "arbitrary"),
            vmem_limit_bytes=vmem_limit,
        ),
        cost_estimate=cost,
    )(x_in, w_prepped)

    return out_padded[:, :out_dim] if padded_m != out_dim else out_padded


def make_fc(weight, *, out_dtype=None):
    """Mirrors FC.__init__: preprocess the weight once, return the forward fn."""
    out_dim = weight.shape[0]
    w_prepped = prepare_fc_weight(weight)
    return functools.partial(fc_forward, w_prepped=w_prepped, out_dim=out_dim,
                             out_dtype=out_dtype)


def fc_reference(x, weight):
    y = x @ weight.T
    return jnp.where(y >= 0, y, _NEG_SLOPE * y)


if __name__ == "__main__":
    # dropout=0.0 (default) -> identity; batchnorm=False (default) -> skipped;
    # bias=False (default) -> no bias add.
    key = jax.random.PRNGKey(0)

    def make_case(case_key, n, d_in, d_out):
        kx, kw = jax.random.split(case_key)
        xs = jax.random.normal(kx, (n, d_in), dtype=jnp.float32)
        bound = 1.0 / (d_in ** 0.5)  # nn.Linear-style uniform init
        ws = jax.random.uniform(kw, (d_out, d_in), minval=-bound, maxval=bound,
                                dtype=jnp.float32)
        return xs, ws

    cases = [
        (8, 32, 32),       # tiny toy-usage shape (K and M both padded to 128)
        (600, 256, 384),   # out_dim tiling (3 M tiles) + non-square weight
    ]
    case_keys = jax.random.split(key, len(cases))
    for case_key, (n, d_in, d_out) in zip(case_keys, cases):
        x, w = make_case(case_key, n, d_in, d_out)
        fc = make_fc(w)                      # one-time weight prep (init-time)
        out = jax.block_until_ready(fc(x))
        ref = fc_reference(x, w)
        assert out.shape == ref.shape, (out.shape, ref.shape)
        # bf16 operands / f32 accumulation -> loosened tolerance vs f32 reference.
        assert jnp.allclose(out, ref, atol=2e-2, rtol=2e-2), (
            f"mismatch vs reference for case {(n, d_in, d_out)}")

    print("KERNEL_OK")
</pallas_src>

<mosaic_0001>
module attributes {stable_mosaic.version = 11 : i64} {
  func.func @_fc_kernel(%arg0: i32, %arg1: i32, %arg2: i32, %arg3: memref<8x128xbf16, #tpu.memory_space<vmem>>, %arg4: memref<128x128xbf16, #tpu.memory_space<vmem>>, %arg5: memref<8x128xf32, #tpu.memory_space<vmem>>, %arg6: memref<8x128xf32, #tpu.memory_space<vmem>>) attributes {dimension_semantics = [#tpu.dimension_semantics<parallel>, #tpu.dimension_semantics<parallel>, #tpu.dimension_semantics<arbitrary>], iteration_bounds = array<i64: 1, 1, 1>, scalar_prefetch = 0 : i64, scratch_operands = 1 : i64, tpu.core_type = #tpu.core_type<tc>, window_params = [{transform_indices = @transform_0, window_bounds = array<i64: 8, 128>}, {transform_indices = @transform_1, window_bounds = array<i64: 128, 128>}, {transform_indices = @transform_2, window_bounds = array<i64: 8, 128>}]} {
    %c0_i32 = arith.constant 0 : i32
    %0 = arith.cmpi eq, %arg2, %c0_i32 : i32
    %1 = arith.extui %0 : i1 to i32
    %c0_i32_0 = arith.constant 0 : i32
    %2 = arith.cmpi ne, %1, %c0_i32_0 : i32
    scf.if %2 {
      %cst_10 = arith.constant 0.000000e+00 : f32
      %12 = vector.broadcast %cst_10 : f32 to vector<8x128xf32>
      %c0_11 = arith.constant 0 : index
      %c0_12 = arith.constant 0 : index
      %13 = vector.load %arg6[%c0_11, %c0_12] : memref<8x128xf32, #tpu.memory_space<vmem>>, vector<8x128xf32>
      tpu.vector_store %arg6[%c0_11, %c0_12], %12 {strides = array<i32>} : memref<8x128xf32, #tpu.memory_space<vmem>>, vector<8x128xf32>,
    } else {
    }
    %c0 = arith.constant 0 : index
    %c0_1 = arith.constant 0 : index
    %3 = vector.load %arg3[%c0, %c0_1] : memref<8x128xbf16, #tpu.memory_space<vmem>>, vector<8x128xbf16>
    %c0_2 = arith.constant 0 : index
    %c0_3 = arith.constant 0 : index
    %4 = vector.load %arg6[%c0_2, %c0_3] : memref<8x128xf32, #tpu.memory_space<vmem>>, vector<8x128xf32>
    %c0_4 = arith.constant 0 : index
    %c0_5 = arith.constant 0 : index
    %5 = vector.load %arg4[%c0_4, %c0_5] : memref<128x128xbf16, #tpu.memory_space<vmem>>, vector<128x128xbf16>
    %cst = arith.constant dense<0.000000e+00> : vector<8x128xf32>
    %6 = tpu.matmul %3, %5, %cst {dimension_numbers = #tpu.dot_dimension_numbers<[1], [0], [0], [1], [0, 0, 1, 1], [], []>} : vector<8x128xbf16>, vector<128x128xbf16>, vector<8x128xf32> -> vector<8x128xf32>
    %7 = arith.addf %4, %6 : vector<8x128xf32>
    %c0_6 = arith.constant 0 : index
    %c0_7 = arith.constant 0 : index
    %8 = vector.load %arg6[%c0_6, %c0_7] : memref<8x128xf32, #tpu.memory_space<vmem>>, vector<8x128xf32>
    tpu.vector_store %arg6[%c0_6, %c0_7], %7 {strides = array<i32>} : memref<8x128xf32, #tpu.memory_space<vmem>>, vector<8x128xf32>,
    %c0_i32_8 = arith.constant 0 : i32
    %9 = arith.cmpi eq, %arg2, %c0_i32_8 : i32
    %10 = arith.extui %9 : i1 to i32
    %c0_i32_9 = arith.constant 0 : i32
    %11 = arith.cmpi ne, %10, %c0_i32_9 : i32
    scf.if %11 {
      %c0_10 = arith.constant 0 : index
      %c0_11 = arith.constant 0 : index
      %12 = vector.load %arg6[%c0_10, %c0_11] : memref<8x128xf32, #tpu.memory_space<vmem>>, vector<8x128xf32>
      %cst_12 = arith.constant 0.000000e+00 : f32
      %13 = vector.broadcast %cst_12 : f32 to vector<8x128xf32>
      %14 = arith.cmpf oge, %12, %13 : vector<8x128xf32>
      %cst_13 = arith.constant 0.00999999977 : f32
      %15 = vector.broadcast %cst_13 : f32 to vector<8x128xf32>
      %16 = arith.mulf %15, %12 : vector<8x128xf32>
      %17 = arith.select %14, %12, %16 : vector<8x128xi1>, vector<8x128xf32>
      %c0_14 = arith.constant 0 : index
      %c0_15 = arith.constant 0 : index
      %18 = vector.load %arg5[%c0_14, %c0_15] : memref<8x128xf32, #tpu.memory_space<vmem>>, vector<8x128xf32>
      tpu.vector_store %arg5[%c0_14, %c0_15], %17 {strides = array<i32>} : memref<8x128xf32, #tpu.memory_space<vmem>>, vector<8x128xf32>,
    } else {
    }
    return
  }
  func.func @transform_0(%arg0: i32, %arg1: i32, %arg2: i32) -> (i32, i32) {
    %c0_i32 = arith.constant 0 : i32
    return %arg0, %arg2 : i32, i32
  }
  func.func @transform_1(%arg0: i32, %arg1: i32, %arg2: i32) -> (i32, i32) {
    %c0_i32 = arith.constant 0 : i32
    return %arg2, %arg1 : i32, i32
  }
  func.func @transform_2(%arg0: i32, %arg1: i32, %arg2: i32) -> (i32, i32) {
    %c0_i32 = arith.constant 0 : i32
    return %arg0, %arg1 : i32, i32
  }
}

</mosaic_0001>

<llo_original>
// kernel: fc_forward.1
$region0: #{fc_forward.1}
  #allocation0 [shape = 'u32[]', space=smem, size = 0x4, offset = 0x4, fixed_abs, tag = 'smem constant byte address 0x4 - core index']
  #allocation1 [shape = 'u32[144,128]{1,0:T(1,128)}', space=vmem, size = 0x12000, scoped, tag = 'internal scratch']
  #allocation2 [shape = 'f32[8,128]{1,0:T(8,128)}', space=vmem, size = 0x1000, scoped, tag = 'scratch operand']
  %s0 = inlined_call_operand.vmem [shape: bf16[8,128], index: 0, kind: input, shape index: {}]
  %s1 = inlined_call_operand.hbm [shape: bf16[128,128], index: 1, kind: input, shape index: {}]
  %s2 = inlined_call_operand.hbm [shape: f32[8,128], index: 2, kind: output, shape index: {}]
  %s3 = sld [smem:[#allocation0]]
  $region30: #{fc_forward.1} parent=0
    _
  %s5 = ssub.s32 1, %s3
  %s6 = scalar_select 0, %s5, %s3
  $region1: #{fc_forward.1} parent=0
    #allocation3 [shape = 'u8[32768]{0}', space=vmem, size = 0x8000, scoped, tag = 'input window, operand 1, single buffered']
    #allocation4 [shape = 's32[1]{0}', space=sflag, size = 0x4, scoped, tag = 'scoped memory for fc_forward.1']
    #allocation5 [shape = 's32[1]{0}', space=sflag, size = 0x4, scoped, tag = 'scoped memory for fc_forward.1']
    #allocation6 [shape = 'u8[4096]{0}', space=vmem, size = 0x1000, scoped, tag = 'output window, operand 0, single buffered']
    %7 = vsyncpa [#allocation4], 0
    %8 = vsyncpa [#allocation5], 0
    // Predicated region
    $region2: #{fc_forward.1} parent=1 // pred_check
      _
    $region3: #{fc_forward.1} parent=1 // pred_check_branch
      %10 = sbr.rel (0) target = $region5
    $region4: #{fc_forward.1} parent=1 // pred_region
      _
    $region5: #{fc_forward.1} parent=1 // pred_fallthru
      _
    // Predicated region
    $region6: #{fc_forward.1} parent=1 // pred_check
      _
    $region7: #{fc_forward.1} parent=1 // pred_check_branch
      %12 = sbr.rel (0) target = $region9
    $region8: #{fc_forward.1} parent=1 // pred_region
      %s14 = ssub.s32 1024, 1024
      %15 = vsyncadd [#allocation4], %s14
      %s16 = sshll.u32 [#allocation3], 4
      %s17 = int_to_ptr.vmem [resolvable:$true] %s16
      %22 = dma.hbm_to_vmem [thread:$0]  %s1, 1024, %s17, [#allocation4], 64, 64, 4
    $region9: #{fc_forward.1} parent=1 // pred_fallthru
      _
    // Predicated region
    $region10: #{fc_forward.1} parent=1 // pred_check
      _
    $region11: #{fc_forward.1} parent=1 // pred_check_branch
      %24 = sbr.rel (0) target = $region13
    $region12: #{fc_forward.1} parent=1 // pred_region
      %25 = dma.done [#allocation4], 1024
    $region13: #{fc_forward.1} parent=1 // pred_fallthru
      _
    %p27 = scmp.eq.s32.totalorder 0, 0
    // Predicated region
    $region14: #{fc_forward.1} parent=1 // pred_check
      %p28 = pneg %p27
    $region15: #{fc_forward.1} parent=1 // pred_check_branch
      %30 = sbr.rel (%p28) target = $region17
    $region16: #{fc_forward.1} parent=1 // pred_region
      %31 = vst [vmem:[#allocation2] sm:$0xff] 0.0
    $region17: #{fc_forward.1} parent=1 // pred_fallthru
      _
    %v32 = vld [vmem:[%s0] sm:$0xf]
    %v33 = vld [vmem:[#allocation2] sm:$0xff]
    %v34 = vld [vmem:[#allocation3] sm:$0xf]
    %v35 = vld [vmem:[#allocation3 + $0x4] sm:$0xf]
    %v36 = vld [vmem:[#allocation3 + $0x8] sm:$0xf]
    %v37 = vld [vmem:[#allocation3 + $0xc] sm:$0xf]
    %v38 = vld [vmem:[#allocation3 + $0x10] sm:$0xf]
    %v39 = vld [vmem:[#allocation3 + $0x14] sm:$0xf]
    %v40 = vld [vmem:[#allocation3 + $0x18] sm:$0xf]
    %v41 = vld [vmem:[#allocation3 + $0x1c] sm:$0xf]
    %v42 = vld [vmem:[#allocation3 + $0x20] sm:$0xf]
    %v43 = vld [vmem:[#allocation3 + $0x24] sm:$0xf]
    %v44 = vld [vmem:[#allocation3 + $0x28] sm:$0xf]
    %v45 = vld [vmem:[#allocation3 + $0x2c] sm:$0xf]
    %v46 = vld [vmem:[#allocation3 + $0x30] sm:$0xf]
    %v47 = vld [vmem:[#allocation3 + $0x34] sm:$0xf]
    %v48 = vld [vmem:[#allocation3 + $0x38] sm:$0xf]
    %v49 = vld [vmem:[#allocation3 + $0x3c] sm:$0xf]
    %v66 = vunpack.c.l.b16 %v34
    %v67 = vunpack.c.l.b16 %v35
    %v68 = vunpack.c.l.b16 %v36
    %v69 = vunpack.c.l.b16 %v37
    %v70 = vunpack.c.l.b16 %v38
    %v71 = vunpack.c.l.b16 %v39
    %v72 = vunpack.c.l.b16 %v40
    %v73 = vunpack.c.l.b16 %v41
    %v74 = vunpack.c.l.b16 %v42
    %v75 = vunpack.c.l.b16 %v43
    %v76 = vunpack.c.l.b16 %v44
    %v77 = vunpack.c.l.b16 %v45
    %v78 = vunpack.c.l.b16 %v46
    %v79 = vunpack.c.l.b16 %v47
    %v80 = vunpack.c.l.b16 %v48
    %v81 = vunpack.c.l.b16 %v49
    %v82 = vpack.c.b16 %v67, %v66
    %v83 = vpack.c.b16 %v69, %v68
    %v84 = vpack.c.b16 %v71, %v70
    %v85 = vpack.c.b16 %v73, %v72
    %v86 = vpack.c.b16 %v75, %v74
    %v87 = vpack.c.b16 %v77, %v76
    %v88 = vpack.c.b16 %v79, %v78
    %v89 = vpack.c.b16 %v81, %v80
    %98 = vmatprep.subr.bf16.mxu0 0
    %99 = vmatpush1.bf16.msra.mxu0 %v82
    %100 = vmatprep.subr.bf16.mxu0 0
    %101 = vmatpush1.bf16.msra.mxu0 %v83
    %102 = vmatprep.subr.bf16.mxu0 0
    %103 = vmatpush1.bf16.msra.mxu0 %v84
    %104 = vmatprep.subr.bf16.mxu0 0
    %105 = vmatpush1.bf16.msra.mxu0 %v85
    %106 = vmatprep.subr.bf16.mxu0 0
    %107 = vmatpush1.bf16.msra.mxu0 %v86
    %108 = vmatprep.subr.bf16.mxu0 0
    %109 = vmatpush1.bf16.msra.mxu0 %v87
    %110 = vmatprep.subr.bf16.mxu0 0
    %111 = vmatpush1.bf16.msra.mxu0 %v88
    %112 = vmatprep.subr.bf16.mxu0 0
    %113 = vmatpush1.bf16.msra.mxu0 %v89
    %114 = vmatprep.subr.bf16.mxu0 0
    %115 = vmatpush1.bf16.msra.mxu0 0
    %116 = vmatprep.subr.bf16.mxu0 0
    %117 = vmatpush1.bf16.msra.mxu0 0
    %118 = vmatprep.subr.bf16.mxu0 0
    %119 = vmatpush1.bf16.msra.mxu0 0
    %120 = vmatprep.subr.bf16.mxu0 0
    %121 = vmatpush1.bf16.msra.mxu0 0
    %122 = vmatprep.subr.bf16.mxu0 0
    %123 = vmatpush1.bf16.msra.mxu0 0
    %124 = vmatprep.subr.bf16.mxu0 0
    %125 = vmatpush1.bf16.msra.mxu0 0
    %126 = vmatprep.subr.bf16.mxu0 0
    %127 = vmatpush1.bf16.msra.mxu0 0
    %128 = vmatprep.subr.bf16.mxu0 0
    %129 = vmatpush1.bf16.msra.mxu0 0
    %130 = vmatprep.mubr.bf16.mxu0 0
    %131 = vmatmul.mubr.bf16.gmra.mrb[0].mxu0 %v32
    %v132 = vpop.f32.mrb[0].mxu0
    %v133 = vadd.f32 0.0, %v132
    %v134 = vpop.f32.mrb[0].mxu0
    %v135 = vpop.f32.mrb[0].mxu0
    %v136 = vpop.f32.mrb[0].mxu0
    %137 = vdwg.mxu0
    %v138 = vadd.f32 %v33, %v133
    %139 = vst [vmem:[#allocation2] sm:$0xff] %v138
    // Predicated region
    $region18: #{fc_forward.1} parent=1 // pred_check
      %p140 = pneg %p27
    $region19: #{fc_forward.1} parent=1 // pred_check_branch
      %142 = sbr.rel (%p140) target = $region21
    $region20: #{fc_forward.1} parent=1 // pred_region
      %v143 = vld [vmem:[#allocation2] sm:$0xff]
      %vm144 = vcmp.ge.f32.partialorder %v143, 0.0
      %v145 = vmul.f32 %v143, 0.01
      %v146 = vsel %vm144, %v143, %v145
      %147 = vst [vmem:[#allocation6] sm:$0xff] %v146
    $region21: #{fc_forward.1} parent=1 // pred_fallthru
      _
    // Predicated region
    $region22: #{fc_forward.1} parent=1 // pred_check
      _
    $region23: #{fc_forward.1} parent=1 // pred_check_branch
      %149 = sbr.rel (0) target = $region25
    $region24: #{fc_forward.1} parent=1 // pred_region
      %s151 = ssub.s32 128, 128
      %152 = vsyncadd [#allocation5], %s151
      %s154 = sshll.u32 [#allocation6], 4
      %s155 = int_to_ptr.vmem [resolvable:$true] %s154
      %157 = dma.vmem_to_hbm [thread:$0]  %s155, 128, %s2, [#allocation5]
    $region25: #{fc_forward.1} parent=1 // pred_fallthru
      _
    // Predicated region
    $region26: #{fc_forward.1} parent=1 // pred_check
      _
    $region27: #{fc_forward.1} parent=1 // pred_check_branch
      %159 = sbr.rel (0) target = $region29
    $region28: #{fc_forward.1} parent=1 // pred_region
      %160 = dma.done [#allocation5], 128
    $region29: #{fc_forward.1} parent=1 // pred_fallthru
      _
    %161 = vsyncpa [#allocation4], 1
    %162 = vsyncpa [#allocation5], 1

</llo_original>
